<compile_context>
chip_gen: v7x
topology: tpu7x:2x2x1
jax: 0.10.0
libtpu: 0.0.40
codegen_flags: <defaults>
</compile_context>

<pallas_src>
import jax
import jax.numpy as jnp
from jax.experimental import pallas as pl
from jax.experimental.pallas import tpu as pltpu

FEAT = 128            # per-backbone embedding width (Linear in = 128 * 3)
NUM_CLASSES = 2       # nn.Linear(128 * 3, 2)
DEFAULT_TILE_B = 4096 # see VMEM budget above; multiple of 16 for bf16 tiles
VMEM_LIMIT_BYTES = 32 * 1024 * 1024


def _round_up(x, m):
    return ((x + m - 1) // m) * m


def _fusion_kernel(res_ref, mob_ref, eff_ref, w_ref, b_ref, o_ref):
    # Equivalent to concat([res, mob, eff], -1) @ W + b, expressed as three
    # accumulated K=128 MXU matmuls against static slices of W -> no (B,384)
    # temporary, no cross-lane relayout.  Inputs may arrive as bf16; cast to
    # f32 in VMEM (VPU) and accumulate in f32.
    f32 = jnp.float32
    acc = jnp.dot(res_ref[...].astype(f32), w_ref[0:FEAT, :],
                  preferred_element_type=f32)
    acc = acc + jnp.dot(mob_ref[...].astype(f32), w_ref[FEAT:2 * FEAT, :],
                        preferred_element_type=f32)
    acc = acc + jnp.dot(eff_ref[...].astype(f32), w_ref[2 * FEAT:3 * FEAT, :],
                        preferred_element_type=f32)
    o_ref[...] = (acc + b_ref[...]).astype(o_ref.dtype)


def vector_fusion(res_emb, mob_emb, eff_emb, w, b, *, tile_b=DEFAULT_TILE_B):
    """res/mob/eff: (B, 128) f32 or bf16; w: (384, 2) f32; b: (1, 2) f32.

    Returns logits (B, 2) f32.
    """
    B = res_emb.shape[0]
    assert res_emb.shape == (B, FEAT)
    assert mob_emb.shape == (B, FEAT)
    assert eff_emb.shape == (B, FEAT)
    assert w.shape == (3 * FEAT, NUM_CLASSES)
    assert b.shape == (1, NUM_CLASSES)

    # Tile selection: as large as the VMEM budget allows, shrunk (16-row
    # aligned, so bf16 (16,128) sublane packing is satisfied) for tiny
    # batches.  No input padding: Pallas masks the ragged last block.
    tile_b = max(16, min(tile_b, _round_up(B, 16)))
    grid = (pl.cdiv(B, tile_b),)

    emb_spec = pl.BlockSpec((tile_b, FEAT), lambda i: (i, 0))
    w_spec = pl.BlockSpec((3 * FEAT, NUM_CLASSES), lambda i: (0, 0))   # resident
    b_spec = pl.BlockSpec((1, NUM_CLASSES), lambda i: (0, 0))          # resident
    out_spec = pl.BlockSpec((tile_b, NUM_CLASSES), lambda i: (i, 0))

    emb_bytes = jnp.dtype(res_emb.dtype).itemsize
    f32_bytes = jnp.dtype(jnp.float32).itemsize
    cost = pl.CostEstimate(
        flops=2 * B * 3 * FEAT * NUM_CLASSES,
        transcendentals=0,
        bytes_accessed=(3 * B * FEAT * emb_bytes
                        + B * NUM_CLASSES * f32_bytes
                        + (3 * FEAT * NUM_CLASSES + NUM_CLASSES) * f32_bytes),
    )

    return pl.pallas_call(
        _fusion_kernel,
        out_shape=jax.ShapeDtypeStruct((B, NUM_CLASSES), jnp.float32),
        grid=grid,
        in_specs=[emb_spec, emb_spec, emb_spec, w_spec, b_spec],
        out_specs=out_spec,
        compiler_params=pltpu.CompilerParams(
            dimension_semantics=("parallel",),
            vmem_limit_bytes=VMEM_LIMIT_BYTES,
        ),
        cost_estimate=cost,
    )(res_emb, mob_emb, eff_emb, w, b)


def _reference(res_emb, mob_emb, eff_emb, w, b):
    fused = jnp.concatenate(
        [res_emb.astype(jnp.float32),
         mob_emb.astype(jnp.float32),
         eff_emb.astype(jnp.float32)], axis=-1)
    return fused @ w + b


if __name__ == "__main__":
    key = jax.random.PRNGKey(0)
    k_res, k_mob, k_eff, k_w, k_b, k_r2, k_m2, k_e2 = jax.random.split(key, 8)

    # Deterministic nn.Linear(384, 2) parameters (PyTorch-style uniform init).
    fan_in = 3 * FEAT
    bound = 1.0 / jnp.sqrt(jnp.float32(fan_in))
    w = jax.random.uniform(k_w, (fan_in, NUM_CLASSES), jnp.float32, -bound, bound)
    b = jax.random.uniform(k_b, (1, NUM_CLASSES), jnp.float32, -bound, bound)

    # --- small-batch demo (B=2, f32 embeddings, single ragged block) -------
    B = 2
    res_emb = jax.random.normal(k_res, (B, FEAT), dtype=jnp.float32)
    mob_emb = jax.random.normal(k_mob, (B, FEAT), dtype=jnp.float32)
    eff_emb = jax.random.normal(k_eff, (B, FEAT), dtype=jnp.float32)

    logits = jax.block_until_ready(vector_fusion(res_emb, mob_emb, eff_emb, w, b))
    ref = _reference(res_emb, mob_emb, eff_emb, w, b)
    assert logits.shape == (B, NUM_CLASSES)
    assert jnp.allclose(logits, ref, atol=1e-5, rtol=1e-5)

    # --- multi-tile / ragged-batch path, bf16 producer dtype ---------------
    # (tile_b=256 forced small so B=1040 exercises full blocks + a masked
    #  ragged last block without any wrapper-side padding.)
    B2 = 1040
    res2 = jax.random.normal(k_r2, (B2, FEAT), dtype=jnp.bfloat16)
    mob2 = jax.random.normal(k_m2, (B2, FEAT), dtype=jnp.bfloat16)
    eff2 = jax.random.normal(k_e2, (B2, FEAT), dtype=jnp.bfloat16)

    logits2 = jax.block_until_ready(
        vector_fusion(res2, mob2, eff2, w, b, tile_b=256))
    ref2 = _reference(res2, mob2, eff2, w, b)
    assert logits2.shape == (B2, NUM_CLASSES)
    assert jnp.allclose(logits2, ref2, atol=1e-4, rtol=1e-4)

    print("KERNEL_OK")
</pallas_src>

<mosaic_0001>
module attributes {stable_mosaic.version = 11 : i64} {
  func.func @_fusion_kernel(%arg0: i32, %arg1: memref<16x128xf32, #tpu.memory_space<vmem>>, %arg2: memref<16x128xf32, #tpu.memory_space<vmem>>, %arg3: memref<16x128xf32, #tpu.memory_space<vmem>>, %arg4: memref<384x2xf32, #tpu.memory_space<vmem>>, %arg5: memref<1x2xf32, #tpu.memory_space<vmem>>, %arg6: memref<16x2xf32, #tpu.memory_space<vmem>>) attributes {dimension_semantics = [#tpu.dimension_semantics<parallel>], iteration_bounds = array<i64: 1>, scalar_prefetch = 0 : i64, scratch_operands = 0 : i64, tpu.core_type = #tpu.core_type<tc>, window_params = [{transform_indices = @transform_0, window_bounds = array<i64: 16, 128>}, {transform_indices = @transform_1, window_bounds = array<i64: 16, 128>}, {transform_indices = @transform_2, window_bounds = array<i64: 16, 128>}, {pipeline_mode = #tpu.pipeline_mode<synchronous>, transform_indices = @transform_3, window_bounds = array<i64: 384, 2>}, {pipeline_mode = #tpu.pipeline_mode<synchronous>, transform_indices = @transform_4, window_bounds = array<i64: 1, 2>}, {transform_indices = @transform_5, window_bounds = array<i64: 16, 2>}]} {
    %c0 = arith.constant 0 : index
    %c0_0 = arith.constant 0 : index
    %0 = vector.load %arg1[%c0, %c0_0] : memref<16x128xf32, #tpu.memory_space<vmem>>, vector<16x128xf32>
    %c0_1 = arith.constant 0 : index
    %c0_2 = arith.constant 0 : index
    %1 = vector.load %arg4[%c0_1, %c0_2] : memref<384x2xf32, #tpu.memory_space<vmem>>, vector<128x2xf32>
    %cst = arith.constant dense<0.000000e+00> : vector<16x2xf32>
    %2 = tpu.matmul %0, %1, %cst {dimension_numbers = #tpu.dot_dimension_numbers<[1], [0], [0], [1], [0, 0, 1, 1], [], []>} : vector<16x128xf32>, vector<128x2xf32>, vector<16x2xf32> -> vector<16x2xf32>
    %c0_3 = arith.constant 0 : index
    %c0_4 = arith.constant 0 : index
    %3 = vector.load %arg2[%c0_3, %c0_4] : memref<16x128xf32, #tpu.memory_space<vmem>>, vector<16x128xf32>
    %c128 = arith.constant 128 : index
    %c0_5 = arith.constant 0 : index
    %4 = vector.load %arg4[%c128, %c0_5] : memref<384x2xf32, #tpu.memory_space<vmem>>, vector<128x2xf32>
    %cst_6 = arith.constant dense<0.000000e+00> : vector<16x2xf32>
    %5 = tpu.matmul %3, %4, %cst_6 {dimension_numbers = #tpu.dot_dimension_numbers<[1], [0], [0], [1], [0, 0, 1, 1], [], []>} : vector<16x128xf32>, vector<128x2xf32>, vector<16x2xf32> -> vector<16x2xf32>
    %6 = arith.addf %2, %5 : vector<16x2xf32>
    %c0_7 = arith.constant 0 : index
    %c0_8 = arith.constant 0 : index
    %7 = vector.load %arg3[%c0_7, %c0_8] : memref<16x128xf32, #tpu.memory_space<vmem>>, vector<16x128xf32>
    %c256 = arith.constant 256 : index
    %c0_9 = arith.constant 0 : index
    %8 = vector.load %arg4[%c256, %c0_9] : memref<384x2xf32, #tpu.memory_space<vmem>>, vector<128x2xf32>
    %cst_10 = arith.constant dense<0.000000e+00> : vector<16x2xf32>
    %9 = tpu.matmul %7, %8, %cst_10 {dimension_numbers = #tpu.dot_dimension_numbers<[1], [0], [0], [1], [0, 0, 1, 1], [], []>} : vector<16x128xf32>, vector<128x2xf32>, vector<16x2xf32> -> vector<16x2xf32>
    %10 = arith.addf %6, %9 : vector<16x2xf32>
    %c0_11 = arith.constant 0 : index
    %c0_12 = arith.constant 0 : index
    %11 = vector.load %arg5[%c0_11, %c0_12] : memref<1x2xf32, #tpu.memory_space<vmem>>, vector<1x2xf32>
    %12 = vector.broadcast %11 : vector<1x2xf32> to vector<16x2xf32>
    %13 = arith.addf %10, %12 : vector<16x2xf32>
    %c0_13 = arith.constant 0 : index
    %c0_14 = arith.constant 0 : index
    %14 = vector.load %arg6[%c0_13, %c0_14] : memref<16x2xf32, #tpu.memory_space<vmem>>, vector<16x2xf32>
    tpu.vector_store %arg6[%c0_13, %c0_14], %13 {strides = array<i32>} : memref<16x2xf32, #tpu.memory_space<vmem>>, vector<16x2xf32>,
    return
  }
  func.func @transform_0(%arg0: i32) -> (i32, i32) {
    %c0_i32 = arith.constant 0 : i32
    %c0_i32_0 = arith.constant 0 : i32
    return %arg0, %c0_i32 : i32, i32
  }
  func.func @transform_1(%arg0: i32) -> (i32, i32) {
    %c0_i32 = arith.constant 0 : i32
    %c0_i32_0 = arith.constant 0 : i32
    return %arg0, %c0_i32 : i32, i32
  }
  func.func @transform_2(%arg0: i32) -> (i32, i32) {
    %c0_i32 = arith.constant 0 : i32
    %c0_i32_0 = arith.constant 0 : i32
    return %arg0, %c0_i32 : i32, i32
  }
  func.func @transform_3(%arg0: i32) -> (i32, i32) {
    %c0_i32 = arith.constant 0 : i32
    %c0_i32_0 = arith.constant 0 : i32
    %c0_i32_1 = arith.constant 0 : i32
    return %c0_i32, %c0_i32_0 : i32, i32
  }
  func.func @transform_4(%arg0: i32) -> (i32, i32) {
    %c0_i32 = arith.constant 0 : i32
    %c0_i32_0 = arith.constant 0 : i32
    %c0_i32_1 = arith.constant 0 : i32
    return %c0_i32, %c0_i32_0 : i32, i32
  }
  func.func @transform_5(%arg0: i32) -> (i32, i32) {
    %c0_i32 = arith.constant 0 : i32
    %c0_i32_0 = arith.constant 0 : i32
    return %arg0, %c0_i32 : i32, i32
  }
}

</mosaic_0001>

<llo_original>
// kernel: tpu_custom_call.1
$region0: #{tpu_custom_call.1}
  #allocation0 [shape = 'u32[]', space=smem, size = 0x4, offset = 0x4, fixed_abs, tag = 'smem constant byte address 0x4 - core index']
  #allocation1 [shape = 'u32[144,128]{1,0:T(1,128)}', space=vmem, size = 0x12000, scoped, tag = 'internal scratch']
  %s0 = inlined_call_operand.vmem [shape: f32[2,128], index: 0, kind: input, shape index: {}]
  %s1 = inlined_call_operand.vmem [shape: f32[2,128], index: 1, kind: input, shape index: {}]
  %s2 = inlined_call_operand.vmem [shape: f32[2,128], index: 2, kind: input, shape index: {}]
  %s3 = inlined_call_operand.vmem [shape: f32[384,2], index: 3, kind: input, shape index: {}]
  %s4 = inlined_call_operand.vmem [shape: f32[1,2], index: 4, kind: input, shape index: {}]
  %s5 = inlined_call_operand.hbm [shape: f32[2,2], index: 5, kind: output, shape index: {}]
  %s6 = sld [smem:[#allocation0]]
  $region30: #{tpu_custom_call.1} parent=0
    _
  %s8 = ssub.s32 1, %s6
  %s9 = scalar_select 0, %s8, %s6
  $region1: #{tpu_custom_call.1} parent=0
    #allocation2 [shape = 'u8[8192]{0}', space=vmem, size = 0x2000, scoped, tag = 'output window, operand 0, single buffered']
    #allocation3 [shape = 's32[1]{0}', space=sflag, size = 0x4, scoped, tag = 'scoped memory for tpu_custom_call.1']
    %10 = vsyncpa [#allocation3], 0
    // Predicated region
    $region2: #{tpu_custom_call.1} parent=1 // pred_check
      _
    $region3: #{tpu_custom_call.1} parent=1 // pred_check_branch
      %12 = sbr.rel (0) target = $region5
    $region4: #{tpu_custom_call.1} parent=1 // pred_region
      _
    $region5: #{tpu_custom_call.1} parent=1 // pred_fallthru
      _
    // Predicated region
    $region6: #{tpu_custom_call.1} parent=1 // pred_check
      _
    $region7: #{tpu_custom_call.1} parent=1 // pred_check_branch
      %14 = sbr.rel (0) target = $region9
    $region8: #{tpu_custom_call.1} parent=1 // pred_region
      _
    $region9: #{tpu_custom_call.1} parent=1 // pred_fallthru
      _
    // Predicated region
    $region10: #{tpu_custom_call.1} parent=1 // pred_check
      _
    $region11: #{tpu_custom_call.1} parent=1 // pred_check_branch
      %16 = sbr.rel (0) target = $region13
    $region12: #{tpu_custom_call.1} parent=1 // pred_region
      _
    $region13: #{tpu_custom_call.1} parent=1 // pred_fallthru
      _
    // Predicated region
    $region14: #{tpu_custom_call.1} parent=1 // pred_check
      _
    $region15: #{tpu_custom_call.1} parent=1 // pred_check_branch
      %18 = sbr.rel (0) target = $region17
    $region16: #{tpu_custom_call.1} parent=1 // pred_region
      _
    $region17: #{tpu_custom_call.1} parent=1 // pred_fallthru
      _
    // Predicated region
    $region18: #{tpu_custom_call.1} parent=1 // pred_check
      _
    $region19: #{tpu_custom_call.1} parent=1 // pred_check_branch
      %20 = sbr.rel (0) target = $region21
    $region20: #{tpu_custom_call.1} parent=1 // pred_region
      _
    $region21: #{tpu_custom_call.1} parent=1 // pred_fallthru
      _
    %v21 = vld [vmem:[%s0] sm:$0xff]
    %v22 = vld [vmem:[%s0 + $0x8] sm:$0xff]
    %v23 = vld [vmem:[%s3] sm:$0xff]
    %v24 = vld [vmem:[%s3 + $0x8] sm:$0xff]
    %v25 = vld [vmem:[%s3 + $0x10] sm:$0xff]
    %v26 = vld [vmem:[%s3 + $0x18] sm:$0xff]
    %v27 = vld [vmem:[%s3 + $0x20] sm:$0xff]
    %v28 = vld [vmem:[%s3 + $0x28] sm:$0xff]
    %v29 = vld [vmem:[%s3 + $0x30] sm:$0xff]
    %v30 = vld [vmem:[%s3 + $0x38] sm:$0xff]
    %v31 = vld [vmem:[%s3 + $0x40] sm:$0xff]
    %v32 = vld [vmem:[%s3 + $0x48] sm:$0xff]
    %v33 = vld [vmem:[%s3 + $0x50] sm:$0xff]
    %v34 = vld [vmem:[%s3 + $0x58] sm:$0xff]
    %v35 = vld [vmem:[%s3 + $0x60] sm:$0xff]
    %v36 = vld [vmem:[%s3 + $0x68] sm:$0xff]
    %v37 = vld [vmem:[%s3 + $0x70] sm:$0xff]
    %v38 = vld [vmem:[%s3 + $0x78] sm:$0xff]
    %v39 = vld [vmem:[%s1] sm:$0xff]
    %v40 = vld [vmem:[%s1 + $0x8] sm:$0xff]
    %v41 = vld [vmem:[%s3 + $0x80] sm:$0xff]
    %v42 = vld [vmem:[%s3 + $0x88] sm:$0xff]
    %v43 = vld [vmem:[%s3 + $0x90] sm:$0xff]
    %v44 = vld [vmem:[%s3 + $0x98] sm:$0xff]
    %v45 = vld [vmem:[%s3 + $0xa0] sm:$0xff]
    %v46 = vld [vmem:[%s3 + $0xa8] sm:$0xff]
    %v47 = vld [vmem:[%s3 + $0xb0] sm:$0xff]
    %v48 = vld [vmem:[%s3 + $0xb8] sm:$0xff]
    %v49 = vld [vmem:[%s3 + $0xc0] sm:$0xff]
    %v50 = vld [vmem:[%s3 + $0xc8] sm:$0xff]
    %v51 = vld [vmem:[%s3 + $0xd0] sm:$0xff]
    %v52 = vld [vmem:[%s3 + $0xd8] sm:$0xff]
    %v53 = vld [vmem:[%s3 + $0xe0] sm:$0xff]
    %v54 = vld [vmem:[%s3 + $0xe8] sm:$0xff]
    %v55 = vld [vmem:[%s3 + $0xf0] sm:$0xff]
    %v56 = vld [vmem:[%s3 + $0xf8] sm:$0xff]
    %57 = vmatprep.subr.mxu0 0.0
    %58 = vmatpush1.msra.mxu0 %v41
    %59 = vmatprep.subr.mxu0 0.0
    %60 = vmatpush1.msra.mxu0 %v42
    %61 = vmatprep.subr.mxu0 0.0
    %62 = vmatpush1.msra.mxu0 %v43
    %63 = vmatprep.subr.mxu0 0.0
    %64 = vmatpush1.msra.mxu0 %v44
    %65 = vmatprep.subr.mxu0 0.0
    %66 = vmatpush1.msra.mxu0 %v45
    %67 = vmatprep.subr.mxu0 0.0
    %68 = vmatpush1.msra.mxu0 %v46
    %69 = vmatprep.subr.mxu0 0.0
    %70 = vmatpush1.msra.mxu0 %v47
    %71 = vmatprep.subr.mxu0 0.0
    %72 = vmatpush1.msra.mxu0 %v48
    %73 = vmatprep.subr.mxu0 0.0
    %74 = vmatpush1.msra.mxu0 %v49
    %75 = vmatprep.subr.mxu0 0.0
    %76 = vmatpush1.msra.mxu0 %v50
    %77 = vmatprep.subr.mxu0 0.0
    %78 = vmatpush1.msra.mxu0 %v51
    %79 = vmatprep.subr.mxu0 0.0
    %80 = vmatpush1.msra.mxu0 %v52
    %81 = vmatprep.subr.mxu0 0.0
    %82 = vmatpush1.msra.mxu0 %v53
    %83 = vmatprep.subr.mxu0 0.0
    %84 = vmatpush1.msra.mxu0 %v54
    %85 = vmatprep.subr.mxu0 0.0
    %86 = vmatpush1.msra.mxu0 %v55
    %87 = vmatprep.subr.mxu0 0.0
    %88 = vmatpush1.msra.mxu0 %v56
    %89 = vmatprep.subr.mxu0 0.0
    %90 = vmatpush1.msra.mxu0 0.0
    %91 = vmatprep.subr.mxu0 0.0
    %92 = vmatpush1.msra.mxu0 0.0
    %93 = vmatprep.subr.mxu0 0.0
    %94 = vmatpush1.msra.mxu0 0.0
    %95 = vmatprep.subr.mxu0 0.0
    %96 = vmatpush1.msra.mxu0 0.0
    %97 = vmatprep.subr.mxu0 0.0
    %98 = vmatpush1.msra.mxu0 0.0
    %99 = vmatprep.subr.mxu0 0.0
    %100 = vmatpush1.msra.mxu0 0.0
    %101 = vmatprep.subr.mxu0 0.0
    %102 = vmatpush1.msra.mxu0 0.0
    %103 = vmatprep.subr.mxu0 0.0
    %104 = vmatpush1.msra.mxu0 0.0
    %105 = vmatprep.subr.mxu0 0.0
    %106 = vmatpush1.msra.mxu0 0.0
    %107 = vmatprep.subr.mxu0 0.0
    %108 = vmatpush1.msra.mxu0 0.0
    %109 = vmatprep.subr.mxu0 0.0
    %110 = vmatpush1.msra.mxu0 0.0
    %111 = vmatprep.subr.mxu0 0.0
    %112 = vmatpush1.msra.mxu0 0.0
    %113 = vmatprep.subr.mxu0 0.0
    %114 = vmatpush1.msra.mxu0 0.0
    %115 = vmatprep.subr.mxu0 0.0
    %116 = vmatpush1.msra.mxu0 0.0
    %117 = vmatprep.subr.mxu0 0.0
    %118 = vmatpush1.msra.mxu0 0.0
    %119 = vmatprep.subr.mxu0 0.0
    %120 = vmatpush1.msra.mxu0 0.0
    %121 = vmatprep.mubr.f32.mxu0 0.0
    %122 = vmatmul.mubr.f32.gmra.mrb[0].mxu0 %v39
    %v123 = vpop.f32.mrb[0].mxu0
    %v124 = vadd.f32 0.0, %v123
    %v125 = vpop.f32.mrb[0].mxu0
    %126 = vmatprep.mubr.f32.mxu0 0.0
    %127 = vmatmul.mubr.f32.gmra.mrb[0].mxu0 %v40
    %v128 = vpop.f32.mrb[0].mxu0
    %v129 = vadd.f32 0.0, %v128
    %v130 = vpop.f32.mrb[0].mxu0
    %131 = vdwg.mxu0
    %132 = vmatprep.subr.mxu0 0.0
    %133 = vmatpush1.msra.mxu0 %v23
    %134 = vmatprep.subr.mxu0 0.0
    %135 = vmatpush1.msra.mxu0 %v24
    %136 = vmatprep.subr.mxu0 0.0
    %137 = vmatpush1.msra.mxu0 %v25
    %138 = vmatprep.subr.mxu0 0.0
    %139 = vmatpush1.msra.mxu0 %v26
    %140 = vmatprep.subr.mxu0 0.0
    %141 = vmatpush1.msra.mxu0 %v27
    %142 = vmatprep.subr.mxu0 0.0
    %143 = vmatpush1.msra.mxu0 %v28
    %144 = vmatprep.subr.mxu0 0.0
    %145 = vmatpush1.msra.mxu0 %v29
    %146 = vmatprep.subr.mxu0 0.0
    %147 = vmatpush1.msra.mxu0 %v30
    %148 = vmatprep.subr.mxu0 0.0
    %149 = vmatpush1.msra.mxu0 %v31
    %150 = vmatprep.subr.mxu0 0.0
    %151 = vmatpush1.msra.mxu0 %v32
    %152 = vmatprep.subr.mxu0 0.0
    %153 = vmatpush1.msra.mxu0 %v33
    %154 = vmatprep.subr.mxu0 0.0
    %155 = vmatpush1.msra.mxu0 %v34
    %156 = vmatprep.subr.mxu0 0.0
    %157 = vmatpush1.msra.mxu0 %v35
    %158 = vmatprep.subr.mxu0 0.0
    %159 = vmatpush1.msra.mxu0 %v36
    %160 = vmatprep.subr.mxu0 0.0
    %161 = vmatpush1.msra.mxu0 %v37
    %162 = vmatprep.subr.mxu0 0.0
    %163 = vmatpush1.msra.mxu0 %v38
    %164 = vmatprep.subr.mxu0 0.0
    %165 = vmatpush1.msra.mxu0 0.0
    %166 = vmatprep.subr.mxu0 0.0
    %167 = vmatpush1.msra.mxu0 0.0
    %168 = vmatprep.subr.mxu0 0.0
    %169 = vmatpush1.msra.mxu0 0.0
    %170 = vmatprep.subr.mxu0 0.0
    %171 = vmatpush1.msra.mxu0 0.0
    %172 = vmatprep.subr.mxu0 0.0
    %173 = vmatpush1.msra.mxu0 0.0
    %174 = vmatprep.subr.mxu0 0.0
    %175 = vmatpush1.msra.mxu0 0.0
    %176 = vmatprep.subr.mxu0 0.0
    %177 = vmatpush1.msra.mxu0 0.0
    %178 = vmatprep.subr.mxu0 0.0
    %179 = vmatpush1.msra.mxu0 0.0
    %180 = vmatprep.subr.mxu0 0.0
    %181 = vmatpush1.msra.mxu0 0.0
    %182 = vmatprep.subr.mxu0 0.0
    %183 = vmatpush1.msra.mxu0 0.0
    %184 = vmatprep.subr.mxu0 0.0
    %185 = vmatpush1.msra.mxu0 0.0
    %186 = vmatprep.subr.mxu0 0.0
    %187 = vmatpush1.msra.mxu0 0.0
    %188 = vmatprep.subr.mxu0 0.0
    %189 = vmatpush1.msra.mxu0 0.0
    %190 = vmatprep.subr.mxu0 0.0
    %191 = vmatpush1.msra.mxu0 0.0
    %192 = vmatprep.subr.mxu0 0.0
    %193 = vmatpush1.msra.mxu0 0.0
    %194 = vmatprep.subr.mxu0 0.0
    %195 = vmatpush1.msra.mxu0 0.0
    %196 = vmatprep.mubr.f32.mxu0 0.0
    %197 = vmatmul.mubr.f32.gmra.mrb[0].mxu0 %v21
    %v198 = vpop.f32.mrb[0].mxu0
    %v199 = vadd.f32 %v124, %v198
    %v200 = vpop.f32.mrb[0].mxu0
    %201 = vmatprep.mubr.f32.mxu0 0.0
    %202 = vmatmul.mubr.f32.gmra.mrb[0].mxu0 %v22
    %v203 = vpop.f32.mrb[0].mxu0
    %v204 = vadd.f32 %v129, %v203
    %v205 = vpop.f32.mrb[0].mxu0
    %206 = vdwg.mxu0
    %v207 = vld [vmem:[%s2] sm:$0xff]
    %v208 = vld [vmem:[%s2 + $0x8] sm:$0xff]
    %v209 = vld [vmem:[%s3 + $0x100] sm:$0xff]
    %v210 = vld [vmem:[%s3 + $0x108] sm:$0xff]
    %v211 = vld [vmem:[%s3 + $0x110] sm:$0xff]
    %v212 = vld [vmem:[%s3 + $0x118] sm:$0xff]
    %v213 = vld [vmem:[%s3 + $0x120] sm:$0xff]
    %v214 = vld [vmem:[%s3 + $0x128] sm:$0xff]
    %v215 = vld [vmem:[%s3 + $0x130] sm:$0xff]
    %v216 = vld [vmem:[%s3 + $0x138] sm:$0xff]
    %v217 = vld [vmem:[%s3 + $0x140] sm:$0xff]
    %v218 = vld [vmem:[%s3 + $0x148] sm:$0xff]
    %v219 = vld [vmem:[%s3 + $0x150] sm:$0xff]
    %v220 = vld [vmem:[%s3 + $0x158] sm:$0xff]
    %v221 = vld [vmem:[%s3 + $0x160] sm:$0xff]
    %v222 = vld [vmem:[%s3 + $0x168] sm:$0xff]
    %v223 = vld [vmem:[%s3 + $0x170] sm:$0xff]
    %v224 = vld [vmem:[%s3 + $0x178] sm:$0xff]
    %225 = vmatprep.subr.mxu0 0.0
    %226 = vmatpush1.msra.mxu0 %v209
    %227 = vmatprep.subr.mxu0 0.0
    %228 = vmatpush1.msra.mxu0 %v210
    %229 = vmatprep.subr.mxu0 0.0
    %230 = vmatpush1.msra.mxu0 %v211
    %231 = vmatprep.subr.mxu0 0.0
    %232 = vmatpush1.msra.mxu0 %v212
    %233 = vmatprep.subr.mxu0 0.0
    %234 = vmatpush1.msra.mxu0 %v213
    %235 = vmatprep.subr.mxu0 0.0
    %236 = vmatpush1.msra.mxu0 %v214
    %237 = vmatprep.subr.mxu0 0.0
    %238 = vmatpush1.msra.mxu0 %v215
    %239 = vmatprep.subr.mxu0 0.0
    %240 = vmatpush1.msra.mxu0 %v216
    %241 = vmatprep.subr.mxu0 0.0
    %242 = vmatpush1.msra.mxu0 %v217
    %243 = vmatprep.subr.mxu0 0.0
    %244 = vmatpush1.msra.mxu0 %v218
    %245 = vmatprep.subr.mxu0 0.0
    %246 = vmatpush1.msra.mxu0 %v219
    %247 = vmatprep.subr.mxu0 0.0
    %248 = vmatpush1.msra.mxu0 %v220
    %249 = vmatprep.subr.mxu0 0.0
    %250 = vmatpush1.msra.mxu0 %v221
    %251 = vmatprep.subr.mxu0 0.0
    %252 = vmatpush1.msra.mxu0 %v222
    %253 = vmatprep.subr.mxu0 0.0
    %254 = vmatpush1.msra.mxu0 %v223
    %255 = vmatprep.subr.mxu0 0.0
    %256 = vmatpush1.msra.mxu0 %v224
    %257 = vmatprep.subr.mxu0 0.0
    %258 = vmatpush1.msra.mxu0 0.0
    %259 = vmatprep.subr.mxu0 0.0
    %260 = vmatpush1.msra.mxu0 0.0
    %261 = vmatprep.subr.mxu0 0.0
    %262 = vmatpush1.msra.mxu0 0.0
    %263 = vmatprep.subr.mxu0 0.0
    %264 = vmatpush1.msra.mxu0 0.0
    %265 = vmatprep.subr.mxu0 0.0
    %266 = vmatpush1.msra.mxu0 0.0
    %267 = vmatprep.subr.mxu0 0.0
    %268 = vmatpush1.msra.mxu0 0.0
    %269 = vmatprep.subr.mxu0 0.0
    %270 = vmatpush1.msra.mxu0 0.0
    %271 = vmatprep.subr.mxu0 0.0
    %272 = vmatpush1.msra.mxu0 0.0
    %273 = vmatprep.subr.mxu0 0.0
    %274 = vmatpush1.msra.mxu0 0.0
    %275 = vmatprep.subr.mxu0 0.0
    %276 = vmatpush1.msra.mxu0 0.0
    %277 = vmatprep.subr.mxu0 0.0
    %278 = vmatpush1.msra.mxu0 0.0
    %279 = vmatprep.subr.mxu0 0.0
    %280 = vmatpush1.msra.mxu0 0.0
    %281 = vmatprep.subr.mxu0 0.0
    %282 = vmatpush1.msra.mxu0 0.0
    %283 = vmatprep.subr.mxu0 0.0
    %284 = vmatpush1.msra.mxu0 0.0
    %285 = vmatprep.subr.mxu0 0.0
    %286 = vmatpush1.msra.mxu0 0.0
    %287 = vmatprep.subr.mxu0 0.0
    %288 = vmatpush1.msra.mxu0 0.0
    %289 = vmatprep.mubr.f32.mxu0 0.0
    %290 = vmatmul.mubr.f32.gmra.mrb[0].mxu0 %v207
    %v291 = vpop.f32.mrb[0].mxu0
    %v292 = vadd.f32 0.0, %v291
    %v293 = vpop.f32.mrb[0].mxu0
    %294 = vmatprep.mubr.f32.mxu0 0.0
    %295 = vmatmul.mubr.f32.gmra.mrb[0].mxu0 %v208
    %v296 = vpop.f32.mrb[0].mxu0
    %v297 = vadd.f32 0.0, %v296
    %v298 = vpop.f32.mrb[0].mxu0
    %299 = vdwg.mxu0
    %v300 = vadd.f32 %v199, %v292
    %v301 = vadd.f32 %v204, %v297
    %v302 = vld [vmem:[%s4] sm:$0x1]
    %v304 = vlaneseq
    %v305 = vshrl.u32 %v304, 7
    %v306 = vsub.s32 0, %v305
    %v307 = vrot.slane %v302, %v306
    %v309 = vadd.f32 %v300, %v307
    %v310 = vadd.f32 %v301, %v307
    %vm311 = vcmask 15360
    %312 = vst.msk [vmem:[#allocation2] sm:$0xff] %vm311, %v309
    %313 = vst.msk [vmem:[#allocation2 + $0x8] sm:$0xff] %vm311, %v310
    // Predicated region
    $region22: #{tpu_custom_call.1} parent=1 // pred_check
      _
    $region23: #{tpu_custom_call.1} parent=1 // pred_check_branch
      %315 = sbr.rel (0) target = $region25
    $region24: #{tpu_custom_call.1} parent=1 // pred_region
      %s317 = ssub.s32 256, 32
      %318 = vsyncadd [#allocation3], %s317
      %s319 = sshll.u32 [#allocation2], 4
      %s320 = int_to_ptr.vmem [resolvable:$true] %s319
      %325 = dma.vmem_to_hbm [thread:$0]  %s320, 32, %s5, [#allocation3], 32, 32, 2
    $region25: #{tpu_custom_call.1} parent=1 // pred_fallthru
      _
    // Predicated region
    $region26: #{tpu_custom_call.1} parent=1 // pred_check
      _
    $region27: #{tpu_custom_call.1} parent=1 // pred_check_branch
      %327 = sbr.rel (0) target = $region29
    $region28: #{tpu_custom_call.1} parent=1 // pred_region
      %328 = dma.done [#allocation3], 256
    $region29: #{tpu_custom_call.1} parent=1 // pred_fallthru
      _
    %329 = vsyncpa [#allocation3], 1

</llo_original>
